<compile_context>
chip_gen: v7x
topology: tpu7x:2x2x1
jax: 0.10.0
libtpu: 0.0.40
codegen_flags: <defaults>
</compile_context>

<pallas_src>
import functools

import jax
import jax.numpy as jnp
from jax import lax
from jax.experimental import pallas as pl
from jax.experimental.pallas import tpu as pltpu


def _gemp_kernel(x_ref, o_ref, acc_ref, *, p, p_int, eps, inv_total, tS, S,
                 mask_tail):
    s = pl.program_id(1)

    @pl.when(s == 0)
    def _():
        acc_ref[...] = jnp.zeros_like(acc_ref)

    x = x_ref[...].astype(jnp.float32)            # (tB, C, tS)

    if p_int is not None:
        # Integer exponent: 2 VPU muls (p=3) instead of exp(p*log(x)) on EUP.
        xp = lax.integer_pow(x, p_int)
    else:
        xp = jnp.power(x, jnp.float32(p))

    if mask_tail:
        # Padded last spatial tile: zero out lanes past the true extent S.
        lane = lax.broadcasted_iota(jnp.int32, x.shape, x.ndim - 1)
        valid = S - s * tS                        # > tS for non-last tiles
        xp = jnp.where(lane < valid, xp, 0.0)

    acc_ref[...] += jnp.sum(xp, axis=-1)

    @pl.when(s == pl.num_programs(1) - 1)
    def _():
        mean_p = acc_ref[...] * inv_total
        o_ref[...] = jnp.power(mean_p + eps, 1.0 / p).astype(o_ref.dtype)


def _choose_tiles(B, C, S, itemsize, budget_bytes=4 << 20):
    """Pick (tB, tS) so one in-flight input block stays under budget_bytes.

    tB always divides B (and is a multiple of 8 when < B, so the (tB, C)
    output block respects the (8, 128) tiling constraint). tS is either the
    full S (when S <= 128) or a 128-aligned tile capped at 2048 lanes.
    """
    # Batch tile.
    tB = B
    if B > 8 and B * C * 128 * itemsize > budget_bytes:
        cands = [d for d in range(8, B + 1, 8) if B % d == 0]
        fitting = [d for d in cands if d * C * 128 * itemsize <= budget_bytes]
        if fitting:
            tB = max(fitting)
        elif cands:
            tB = min(cands)
        # else: B has no multiple-of-8 divisor; keep tB = B.

    # Spatial tile.
    if S <= 128:
        tS = S
    else:
        s_pad = ((S + 127) // 128) * 128
        tS = (budget_bytes // max(1, tB * C * itemsize)) // 128 * 128
        tS = max(128, min(tS, 2048, s_pad))
    return tB, tS


def gemp(x, p=3.0, eps=1e-12):
    """Generalized mean pooling. Matches GeMP.forward semantics."""
    orig_ndim = x.ndim
    if orig_ndim == 2:
        # Pool over the feature dim -> (B,). Put B on the sublane axis so
        # vregs are fully occupied (instead of a size-1 channel axis).
        b, f = x.shape
        x3 = x.reshape(1, b, f)
    else:
        b, f = x.shape[:2]
        x3 = x.reshape(b, f, -1)

    B, C, S = x3.shape
    itemsize = jnp.dtype(x3.dtype).itemsize
    tB, tS = _choose_tiles(B, C, S, itemsize)
    n_b = pl.cdiv(B, tB)
    n_s = pl.cdiv(S, tS)
    mask_tail = (S % tS) != 0

    p = float(p)
    p_int = int(round(p)) if p == float(round(p)) else None

    kernel = functools.partial(
        _gemp_kernel, p=p, p_int=p_int, eps=float(eps),
        inv_total=1.0 / float(S), tS=tS, S=S, mask_tail=mask_tail)

    cost = pl.CostEstimate(
        flops=2 * B * C * S,
        transcendentals=(B * C) if p_int is not None else (2 * B * C * S),
        bytes_accessed=B * C * S * itemsize + B * C * itemsize,
    )

    out = pl.pallas_call(
        kernel,
        out_shape=jax.ShapeDtypeStruct((B, C), x3.dtype),
        grid_spec=pltpu.PrefetchScalarGridSpec(
            num_scalar_prefetch=0,
            grid=(n_b, n_s),
            in_specs=[pl.BlockSpec((tB, C, tS), lambda bi, si: (bi, 0, si))],
            out_specs=pl.BlockSpec((tB, C), lambda bi, si: (bi, 0)),
            scratch_shapes=[pltpu.VMEM((tB, C), jnp.float32)],
        ),
        compiler_params=pltpu.CompilerParams(
            dimension_semantics=("parallel", "arbitrary"),
            vmem_limit_bytes=32 * 1024 * 1024,
        ),
        cost_estimate=cost,
    )(x3)

    if orig_ndim == 2:
        out = out.reshape(b)
    return out


def gemp_ref(x, p=3.0, eps=1e-12):
    if x.ndim != 2:
        b, f = x.shape[:2]
        x = x.reshape(b, f, -1)
    return jnp.power(jnp.mean(jnp.power(x, p), axis=-1) + eps, 1.0 / p)


if __name__ == "__main__":
    key = jax.random.PRNGKey(0)

    # --- 4-D case (B, C, H, W), 128-aligned spatial extent -----------------
    B, C, H, W = 2, 4, 16, 16
    # GeM pooling is normally applied to non-negative activations; use abs()
    # so the (1/p) root is well defined (matches PyTorch behavior).
    x = jnp.abs(jax.random.normal(key, (B, C, H, W), dtype=jnp.float32))
    out = jax.block_until_ready(gemp(x, p=3.0, eps=1e-12))
    ref = gemp_ref(x, p=3.0, eps=1e-12)
    assert out.shape == (B, C), out.shape
    assert jnp.allclose(out, ref, rtol=1e-5, atol=1e-6), (out, ref)

    # --- 4-D case with unaligned spatial extent (exercises masked tail) ----
    k1, k2 = jax.random.split(key)
    x_un = jnp.abs(jax.random.normal(k1, (2, 4, 15, 15), dtype=jnp.float32))
    out_un = jax.block_until_ready(gemp(x_un, p=3.0, eps=1e-12))
    ref_un = gemp_ref(x_un, p=3.0, eps=1e-12)
    assert out_un.shape == (2, 4), out_un.shape
    assert jnp.allclose(out_un, ref_un, rtol=1e-5, atol=1e-6), (out_un, ref_un)

    # --- 2-D case (B, F) -> (B,) -------------------------------------------
    x2 = jnp.abs(jax.random.normal(k2, (4, 32), dtype=jnp.float32))
    out2 = jax.block_until_ready(gemp(x2, p=3.0, eps=1e-12))
    ref2 = gemp_ref(x2, p=3.0, eps=1e-12)
    assert out2.shape == (4,), out2.shape
    assert jnp.allclose(out2, ref2, rtol=1e-5, atol=1e-6), (out2, ref2)

    print("KERNEL_OK")
</pallas_src>

<mosaic_0001>
module attributes {stable_mosaic.version = 11 : i64} {
  func.func @_gemp_kernel(%arg0: i32, %arg1: i32, %arg2: memref<2x4x256xf32, #tpu.memory_space<vmem>>, %arg3: memref<2x4xf32, #tpu.memory_space<vmem>>, %arg4: memref<2x4xf32, #tpu.memory_space<vmem>>) attributes {dimension_semantics = [#tpu.dimension_semantics<parallel>, #tpu.dimension_semantics<arbitrary>], iteration_bounds = array<i64: 1, 1>, scalar_prefetch = 0 : i64, scratch_operands = 1 : i64, tpu.core_type = #tpu.core_type<tc>, window_params = [{transform_indices = @transform_0, window_bounds = array<i64: 2, 4, 256>}, {transform_indices = @transform_1, window_bounds = array<i64: 2, 4>}]} {
    %c0_i32 = arith.constant 0 : i32
    %0 = arith.cmpi eq, %arg1, %c0_i32 : i32
    %1 = arith.extui %0 : i1 to i32
    %c0_i32_0 = arith.constant 0 : i32
    %2 = arith.cmpi ne, %1, %c0_i32_0 : i32
    scf.if %2 {
      %cst_9 = arith.constant 0.000000e+00 : f32
      %13 = vector.broadcast %cst_9 : f32 to vector<2x4xf32>
      %c0_10 = arith.constant 0 : index
      %c0_11 = arith.constant 0 : index
      %14 = vector.load %arg4[%c0_10, %c0_11] : memref<2x4xf32, #tpu.memory_space<vmem>>, vector<2x4xf32>
      tpu.vector_store %arg4[%c0_10, %c0_11], %13 {strides = array<i32>} : memref<2x4xf32, #tpu.memory_space<vmem>>, vector<2x4xf32>,
    } else {
    }
    %c0 = arith.constant 0 : index
    %c0_1 = arith.constant 0 : index
    %c0_2 = arith.constant 0 : index
    %3 = vector.load %arg2[%c0, %c0_1, %c0_2] : memref<2x4x256xf32, #tpu.memory_space<vmem>>, vector<2x4x256xf32>
    %4 = arith.mulf %3, %3 : vector<2x4x256xf32>
    %5 = arith.mulf %3, %4 : vector<2x4x256xf32>
    %c0_3 = arith.constant 0 : index
    %c0_4 = arith.constant 0 : index
    %6 = vector.load %arg4[%c0_3, %c0_4] : memref<2x4xf32, #tpu.memory_space<vmem>>, vector<2x4xf32>
    %cst = arith.constant dense<0.000000e+00> : vector<2x4xf32>
    %7 = vector.multi_reduction <add>, %5, %cst [2] : vector<2x4x256xf32> to vector<2x4xf32>
    %8 = arith.addf %6, %7 : vector<2x4xf32>
    %c0_5 = arith.constant 0 : index
    %c0_6 = arith.constant 0 : index
    %9 = vector.load %arg4[%c0_5, %c0_6] : memref<2x4xf32, #tpu.memory_space<vmem>>, vector<2x4xf32>
    tpu.vector_store %arg4[%c0_5, %c0_6], %8 {strides = array<i32>} : memref<2x4xf32, #tpu.memory_space<vmem>>, vector<2x4xf32>,
    %c0_i32_7 = arith.constant 0 : i32
    %10 = arith.cmpi eq, %arg1, %c0_i32_7 : i32
    %11 = arith.extui %10 : i1 to i32
    %c0_i32_8 = arith.constant 0 : i32
    %12 = arith.cmpi ne, %11, %c0_i32_8 : i32
    scf.if %12 {
      %c0_9 = arith.constant 0 : index
      %c0_10 = arith.constant 0 : index
      %13 = vector.load %arg4[%c0_9, %c0_10] : memref<2x4xf32, #tpu.memory_space<vmem>>, vector<2x4xf32>
      %cst_11 = arith.constant 3.906250e-03 : f32
      %14 = vector.broadcast %cst_11 : f32 to vector<2x4xf32>
      %15 = arith.mulf %13, %14 : vector<2x4xf32>
      %cst_12 = arith.constant 9.99999996E-13 : f32
      %16 = vector.broadcast %cst_12 : f32 to vector<2x4xf32>
      %17 = arith.addf %15, %16 : vector<2x4xf32>
      %cst_13 = arith.constant 0.333333343 : f32
      %18 = vector.broadcast %cst_13 : f32 to vector<2x4xf32>
      %19 = math.powf %17, %18 : vector<2x4xf32>
      %c0_14 = arith.constant 0 : index
      %c0_15 = arith.constant 0 : index
      %20 = vector.load %arg3[%c0_14, %c0_15] : memref<2x4xf32, #tpu.memory_space<vmem>>, vector<2x4xf32>
      tpu.vector_store %arg3[%c0_14, %c0_15], %19 {strides = array<i32>} : memref<2x4xf32, #tpu.memory_space<vmem>>, vector<2x4xf32>,
    } else {
    }
    return
  }
  func.func @transform_0(%arg0: i32, %arg1: i32) -> (i32, i32, i32) {
    %c0_i32 = arith.constant 0 : i32
    %c0_i32_0 = arith.constant 0 : i32
    return %arg0, %c0_i32, %arg1 : i32, i32, i32
  }
  func.func @transform_1(%arg0: i32, %arg1: i32) -> (i32, i32) {
    %c0_i32 = arith.constant 0 : i32
    %c0_i32_0 = arith.constant 0 : i32
    return %arg0, %c0_i32 : i32, i32
  }
}

</mosaic_0001>

<llo_original>
// kernel: tpu_custom_call.1
$region0: #{tpu_custom_call.1}
  #allocation0 [shape = 'u32[]', space=smem, size = 0x4, offset = 0x4, fixed_abs, tag = 'smem constant byte address 0x4 - core index']
  #allocation1 [shape = 'u32[144,128]{1,0:T(1,128)}', space=vmem, size = 0x12000, scoped, tag = 'internal scratch']
  #allocation2 [shape = 'f32[2,4]{1,0:T(2,128)}', space=vmem, size = 0x400, scoped, tag = 'scratch operand']
  %s0 = inlined_call_operand.hbm [shape: f32[2,4,256], index: 0, kind: input, shape index: {}]
  %s1 = inlined_call_operand.hbm [shape: f32[2,4], index: 1, kind: output, shape index: {}]
  %s2 = sld [smem:[#allocation0]]
  $region26: #{tpu_custom_call.1} parent=0
    _
  %s4 = ssub.s32 1, %s2
  %s5 = scalar_select 0, %s4, %s2
  $region1: #{tpu_custom_call.1} parent=0
    #allocation3 [shape = 'u8[8192]{0}', space=vmem, size = 0x2000, scoped, tag = 'input window, operand 0, single buffered']
    #allocation4 [shape = 's32[1]{0}', space=sflag, size = 0x4, scoped, tag = 'scoped memory for tpu_custom_call.1']
    #allocation5 [shape = 's32[1]{0}', space=sflag, size = 0x4, scoped, tag = 'scoped memory for tpu_custom_call.1']
    #allocation6 [shape = 'u8[1024]{0}', space=vmem, size = 0x400, scoped, tag = 'output window, operand 0, single buffered']
    %6 = vsyncpa [#allocation4], 0
    %7 = vsyncpa [#allocation5], 0
    // Predicated region
    $region2: #{tpu_custom_call.1} parent=1 // pred_check
      _
    $region3: #{tpu_custom_call.1} parent=1 // pred_check_branch
      %9 = sbr.rel (0) target = $region5
    $region4: #{tpu_custom_call.1} parent=1 // pred_region
      %s11 = ssub.s32 256, 256
      %12 = vsyncadd [#allocation4], %s11
      %s13 = sshll.u32 [#allocation3], 4
      %s14 = int_to_ptr.vmem [resolvable:$true] %s13
      %19 = dma.hbm_to_vmem [thread:$0]  %s0, 256, %s14, [#allocation4], 128, 128, 8
    $region5: #{tpu_custom_call.1} parent=1 // pred_fallthru
      _
    // Predicated region
    $region6: #{tpu_custom_call.1} parent=1 // pred_check
      _
    $region7: #{tpu_custom_call.1} parent=1 // pred_check_branch
      %21 = sbr.rel (0) target = $region9
    $region8: #{tpu_custom_call.1} parent=1 // pred_region
      %22 = dma.done [#allocation4], 256
    $region9: #{tpu_custom_call.1} parent=1 // pred_fallthru
      _
    %p23 = scmp.eq.s32.totalorder 0, 0
    // Predicated region
    $region10: #{tpu_custom_call.1} parent=1 // pred_check
      %p24 = pneg %p23
    $region11: #{tpu_custom_call.1} parent=1 // pred_check_branch
      %26 = sbr.rel (%p24) target = $region13
    $region12: #{tpu_custom_call.1} parent=1 // pred_region
      %vm27 = vcmask 25600
      %28 = vst.msk [vmem:[#allocation2] sm:$0x3] %vm27, 0.0
    $region13: #{tpu_custom_call.1} parent=1 // pred_fallthru
      _
    %v29 = vld [vmem:[#allocation3] sm:$0xff]
    %v30 = vld [vmem:[#allocation3 + $0x8] sm:$0xff]
    %v31 = vmul.f32 %v29, %v29
    %v32 = vmul.f32 %v30, %v30
    %v33 = vmul.f32 %v29, %v31
    %v34 = vmul.f32 %v30, %v32
    %v35 = vld [vmem:[#allocation2] sm:$0x3]
    %v38 = vcombine.high %v33, %v33
    %v39 = vcombine.high %v34, %v34
    %vm42 = vcmask 1043456
    %v43 = vsel %vm42, %v33, 0.0
    %v44 = vsel %vm42, %v38, 0.0
    %v45 = vadd.f32 %v43, %v44
    %46 = vadd.xlane.f32.xlu0 %v45
    %v47 = vpop.xlane.xlu0 %46
    %v48 = vsel %vm42, %v34, 0.0
    %v49 = vsel %vm42, %v39, 0.0
    %v50 = vadd.f32 %v48, %v49
    %51 = vadd.xlane.f32.xlu0 %v50
    %v52 = vpop.xlane.xlu0 %51
    %v55 = vlaneseq
    %v56 = vand.u32 %v55, 127
    %v57 = vlaneseq
    %v58 = vshrl.u32 %v57, 7
    %v59 = vsub.s32 %v56, %v58
    %v60 = vrot.slane %v47, %v59
    %v61 = vlaneseq
    %v62 = vshrl.u32 %v61, 7
    %v63 = vsub.s32 %v56, %v62
    %v64 = vrot.slane %v52, %v63
    %vm65 = vcmask 1041409
    %v66 = vsel %vm65, %v64, %v60
    %v68 = vadd.f32 %v35, %v66
    %vm69 = vcmask 25600
    %70 = vst.msk [vmem:[#allocation2] sm:$0x3] %vm69, %v68
    // Predicated region
    $region14: #{tpu_custom_call.1} parent=1 // pred_check
      %p71 = pneg %p23
    $region15: #{tpu_custom_call.1} parent=1 // pred_check_branch
      %73 = sbr.rel (%p71) target = $region17
    $region16: #{tpu_custom_call.1} parent=1 // pred_region
      %v74 = vld [vmem:[#allocation2] sm:$0x3]
      %v75 = vmul.f32 %v74, 0.00390625
      %v76 = vadd.f32 %v75, 1e-12
      %v77 = vpow.f32 %v76, 0.33333334
      %78 = vst.msk [vmem:[#allocation6] sm:$0x3] %vm69, %v77
    $region17: #{tpu_custom_call.1} parent=1 // pred_fallthru
      _
    // Predicated region
    $region18: #{tpu_custom_call.1} parent=1 // pred_check
      _
    $region19: #{tpu_custom_call.1} parent=1 // pred_check_branch
      %80 = sbr.rel (0) target = $region21
    $region20: #{tpu_custom_call.1} parent=1 // pred_region
      %s82 = ssub.s32 32, 32
      %83 = vsyncadd [#allocation5], %s82
      %s85 = sshll.u32 [#allocation6], 4
      %s86 = int_to_ptr.vmem [resolvable:$true] %s85
      %88 = dma.vmem_to_hbm [thread:$0]  %s86, 32, %s1, [#allocation5]
    $region21: #{tpu_custom_call.1} parent=1 // pred_fallthru
      _
    // Predicated region
    $region22: #{tpu_custom_call.1} parent=1 // pred_check
      _
    $region23: #{tpu_custom_call.1} parent=1 // pred_check_branch
      %90 = sbr.rel (0) target = $region25
    $region24: #{tpu_custom_call.1} parent=1 // pred_region
      %91 = dma.done [#allocation5], 32
    $region25: #{tpu_custom_call.1} parent=1 // pred_fallthru
      _
    %92 = vsyncpa [#allocation4], 1
    %93 = vsyncpa [#allocation5], 1

</llo_original>
